<compile_context>
chip_gen: v5e
topology: v5e:2x2
jax: 0.10.0
libtpu: 0.0.40
codegen_flags: <defaults>
</compile_context>

<pallas_src>
import functools

import jax
import jax.numpy as jnp
from jax.experimental import pallas as pl
from jax.experimental.pallas import tpu as pltpu

VMEM_LIMIT = 32 * 1024 * 1024  # >= v6e/v7x scoped defaults; lifts v5e's 16 MiB default.


def _round_up(x, m):
    return ((x + m - 1) // m) * m


def _choose_tile(n, cap=4096):
    """Pad n to a lane-friendly size and pick the largest tile <= cap that divides it."""
    if n >= cap:
        pad = _round_up(n, 512)
    else:
        pad = _round_up(n, 128)
    for t in (4096, 2048, 1024, 512, 256, 128):
        if t <= cap and pad % t == 0:
            return pad, t
    return pad, 128


# --------------------------------------------------------------------------- #
# Fused kernel: conv-as-matmul (3 depth taps, bf16 MXU, f32 acc) + folded BN
# affine + tanh/sigmoid gates + QRNN f-pooling recurrence along depth.
#   grid = (j: spatial column tiles [parallel], d: output depth [arbitrary])
#   h carry lives in VMEM scratch, reset at d == 0.
# --------------------------------------------------------------------------- #
def _qrnn_layer_kernel(w_ref, b_ref, p0_ref, p1_ref, p2_ref, o_ref, h_ref, *, hidden_p):
    # w_ref : (3, 2*hidden_p, C*9)  bf16  per-kd weight slabs, BN scale folded (pad rows zero)
    # b_ref : (2*hidden_p, 1)       f32   folded BN bias
    # pK_ref: (1, C*9, TJ)          bf16  9-tap columns of input depth plane d_in + kd
    # o_ref : (1, hidden_p, TJ)     f32   pooled hidden state h_d
    # h_ref : (hidden_p, TJ)        f32   recurrence carry (scratch)
    d = pl.program_id(1)

    @pl.when(d == 0)
    def _():
        h_ref[...] = jnp.zeros_like(h_ref)

    y = jnp.dot(w_ref[0], p0_ref[0], preferred_element_type=jnp.float32)
    y = y + jnp.dot(w_ref[1], p1_ref[0], preferred_element_type=jnp.float32)
    y = y + jnp.dot(w_ref[2], p2_ref[0], preferred_element_type=jnp.float32)
    y = y + b_ref[...]

    z = jnp.tanh(y[:hidden_p, :])
    f = jax.nn.sigmoid(y[hidden_p:, :])
    h = f * h_ref[...] + (1.0 - f) * z          # h_{-1} = None  ==  0
    h_ref[...] = h
    o_ref[0] = h


def qrnn_fused_layer(cols9, w3, b_p, *, hidden_p, tile_j, d_out, sd, reverse):
    Dp, C9, BHWp = cols9.shape
    n_rows = w3.shape[1]
    grid = (BHWp // tile_j, d_out)

    def d_eff(d):
        return d_out - 1 - d if reverse else d

    def col_map(kd):
        return lambda j, d: (d_eff(d) * sd + kd, 0, j)

    out_map = lambda j, d: (d_eff(d), 0, j)

    return pl.pallas_call(
        functools.partial(_qrnn_layer_kernel, hidden_p=hidden_p),
        out_shape=jax.ShapeDtypeStruct((d_out, hidden_p, BHWp), jnp.float32),
        grid=grid,
        in_specs=[
            pl.BlockSpec((3, n_rows, C9), lambda j, d: (0, 0, 0)),
            pl.BlockSpec((n_rows, 1), lambda j, d: (0, 0)),
            pl.BlockSpec((1, C9, tile_j), col_map(0)),
            pl.BlockSpec((1, C9, tile_j), col_map(1)),
            pl.BlockSpec((1, C9, tile_j), col_map(2)),
        ],
        out_specs=pl.BlockSpec((1, hidden_p, tile_j), out_map),
        scratch_shapes=[pltpu.VMEM((hidden_p, tile_j), jnp.float32)],
        compiler_params=pltpu.CompilerParams(
            dimension_semantics=("parallel", "arbitrary"),
            vmem_limit_bytes=VMEM_LIMIT,
        ),
    )(w3, b_p, cols9, cols9, cols9)


# --------------------------------------------------------------------------- #
# JAX glue: 9-tap (kh, kw) im2col per depth plane, padding 1, arbitrary HW stride.
# Layout [D + 2 (zero depth halo), C*9, B*H_out*W_out_pad] (bf16); the kernel's three
# shifted BlockSpecs supply the depth taps.
# --------------------------------------------------------------------------- #
def _build_cols9(x, stride, bhw_pad):
    B, C, D, H, W = x.shape
    sd, sh, sw = stride
    Do = (D + 2 - 3) // sd + 1
    Ho = (H + 2 - 3) // sh + 1
    Wo = (W + 2 - 3) // sw + 1
    xp = jnp.pad(x, ((0, 0), (0, 0), (0, 0), (1, 1), (1, 1)))
    cols = []
    for kh in range(3):
        for kw in range(3):
            cols.append(xp[
                :, :, :,
                kh: kh + (Ho - 1) * sh + 1: sh,
                kw: kw + (Wo - 1) * sw + 1: sw,
            ])
    p = jnp.stack(cols, axis=0)                # [9, B, C, D, Ho, Wo]
    p = p.transpose(3, 2, 0, 1, 4, 5)          # [D, C, 9, B, Ho, Wo]  (K order == weight flatten)
    p = p.reshape(D, C * 9, B * Ho * Wo)
    bhw = B * Ho * Wo
    if bhw_pad != bhw:
        p = jnp.pad(p, ((0, 0), (0, 0), (0, bhw_pad - bhw)))
    p = jnp.pad(p, ((1, 1), (0, 0), (0, 0)))   # zero halo planes == depth padding 1
    return p.astype(jnp.bfloat16), (B, Do, Ho, Wo)


# --------------------------------------------------------------------------- #
# One QRNN 3D conv layer (QRNNConv3D / QRNNDownConv3D)
# --------------------------------------------------------------------------- #
@functools.partial(jax.jit, static_argnames=("stride", "reverse", "hidden", "hidden_p"))
def qrnn_conv3d_layer(x, w3, b_p, *, stride, reverse, hidden, hidden_p):
    B, C, D, H, W = x.shape
    sd, sh, sw = stride
    Ho = (H + 2 - 3) // sh + 1
    Wo = (W + 2 - 3) // sw + 1
    bhw = B * Ho * Wo
    bhw_pad, tile_j = _choose_tile(bhw)

    cols9, (B, Do, Ho, Wo) = _build_cols9(x, stride, bhw_pad)
    h = qrnn_fused_layer(cols9, w3, b_p, hidden_p=hidden_p, tile_j=tile_j,
                         d_out=Do, sd=sd, reverse=reverse)          # [Do, hidden_p, bhw_pad] f32

    h = h[:, :hidden, :bhw]
    h = h.reshape(Do, hidden, B, Ho, Wo).transpose(2, 1, 0, 3, 4)   # [B, hidden, Do, Ho, Wo]
    return h


# --------------------------------------------------------------------------- #
# Parameter init (Conv3d kaiming-uniform style) + eval-mode BN fold + padding
# --------------------------------------------------------------------------- #
def init_layer_params(key, in_ch, hidden):
    n_out = 2 * hidden
    fan_in = in_ch * 27
    bound = 1.0 / jnp.sqrt(float(fan_in))
    w = jax.random.uniform(key, (n_out, in_ch, 3, 3, 3), jnp.float32, -bound, bound)
    eps = 1e-5
    gamma = jnp.ones((n_out,), jnp.float32)
    beta = jnp.zeros((n_out,), jnp.float32)
    mean = jnp.zeros((n_out,), jnp.float32)
    var = jnp.ones((n_out,), jnp.float32)
    scale = gamma / jnp.sqrt(var + eps)
    bias = beta - mean * scale
    return w, scale, bias


def prepare_layer_params(w, scale, bias, hidden):
    # Fold BN scale into the conv weight, split into per-kd slabs, pad each gate group to a
    # multiple of 8 rows (sublane-aligned z/f split), and cast to bf16 for the MXU.
    n_out, C = w.shape[0], w.shape[1]
    hidden_p = _round_up(hidden, 8)
    w_s = w * scale[:, None, None, None, None]
    w_kd = w_s.transpose(2, 0, 1, 3, 4).reshape(3, n_out, C * 9)   # (kd, n, c*9+kh*3+kw)
    w_p = jnp.zeros((3, 2 * hidden_p, C * 9), jnp.float32)
    w_p = w_p.at[:, :hidden].set(w_kd[:, :hidden])
    w_p = w_p.at[:, hidden_p:hidden_p + hidden].set(w_kd[:, hidden:])
    b_p = jnp.zeros((2 * hidden_p, 1), jnp.float32)
    b_p = b_p.at[:hidden, 0].set(bias[:hidden])
    b_p = b_p.at[hidden_p:hidden_p + hidden, 0].set(bias[hidden:])
    return w_p.astype(jnp.bfloat16), b_p, hidden_p


# --------------------------------------------------------------------------- #
# Encoder
# --------------------------------------------------------------------------- #
class Encoder:
    def __init__(self, channels, num_half_layer, sample_idx, key):
        self.layers = []
        keys = jax.random.split(key, num_half_layer)
        for i in range(num_half_layer):
            if i not in sample_idx:
                # PlainConv: QRNNConv3D(channels, channels), k=3, s=1, p=1
                hidden = channels
                stride = (1, 1, 1)
            else:
                # DownConv: QRNNDownConv3D(channels, 2*channels, 3, (1,2,2), 1)
                hidden = 2 * channels
                stride = (1, 2, 2)
            w, scale, bias = init_layer_params(keys[i], channels, hidden)
            w_p, b_p, hidden_p = prepare_layer_params(w, scale, bias, hidden)
            self.layers.append((w_p, b_p, hidden, hidden_p, stride))
            channels = hidden

    def __call__(self, x, xs, reverse):
        num_half_layer = len(self.layers)
        for i in range(num_half_layer - 1):
            w_p, b_p, hidden, hidden_p, stride = self.layers[i]
            x = qrnn_conv3d_layer(x, w_p, b_p, stride=stride, reverse=reverse,
                                  hidden=hidden, hidden_p=hidden_p)
            reverse = not reverse
            xs.append(x)
        w_p, b_p, hidden, hidden_p, stride = self.layers[-1]
        x = qrnn_conv3d_layer(x, w_p, b_p, stride=stride, reverse=reverse,
                              hidden=hidden, hidden_p=hidden_p)
        reverse = not reverse
        return x


if __name__ == "__main__":
    key = jax.random.PRNGKey(0)
    k_x, k_p = jax.random.split(key)

    B, C, D, H, W = 2, 4, 8, 16, 16
    x = jax.random.normal(k_x, (B, C, D, H, W), jnp.float32)

    enc = Encoder(channels=C, num_half_layer=3, sample_idx=[1], key=k_p)

    xs = []
    out = enc(x, xs, reverse=False)
    out = jax.block_until_ready(out)
    xs = [jax.block_until_ready(t) for t in xs]

    assert out.shape == (2, 8, 8, 8, 8), out.shape
    assert xs[0].shape == (2, 4, 8, 16, 16), xs[0].shape
    assert xs[1].shape == (2, 8, 8, 8, 8), xs[1].shape
    assert bool(jnp.all(jnp.isfinite(out)))

    print("KERNEL_OK")
</pallas_src>

<mosaic_0001>
module attributes {stable_mosaic.version = 11 : i64} {
  func.func @_qrnn_layer_kernel(%arg0: i32, %arg1: i32, %arg2: memref<3x16x36xbf16, #tpu.memory_space<vmem>>, %arg3: memref<16x1xf32, #tpu.memory_space<vmem>>, %arg4: memref<1x36x512xbf16, #tpu.memory_space<vmem>>, %arg5: memref<1x36x512xbf16, #tpu.memory_space<vmem>>, %arg6: memref<1x36x512xbf16, #tpu.memory_space<vmem>>, %arg7: memref<1x8x512xf32, #tpu.memory_space<vmem>>, %arg8: memref<8x512xf32, #tpu.memory_space<vmem>>) attributes {dimension_semantics = [#tpu.dimension_semantics<parallel>, #tpu.dimension_semantics<arbitrary>], iteration_bounds = array<i64: 1, 8>, scalar_prefetch = 0 : i64, scratch_operands = 1 : i64, tpu.core_type = #tpu.core_type<tc>, window_params = [{pipeline_mode = #tpu.pipeline_mode<synchronous>, transform_indices = @transform_0, window_bounds = array<i64: 3, 16, 36>}, {pipeline_mode = #tpu.pipeline_mode<synchronous>, transform_indices = @transform_1, window_bounds = array<i64: 16, 1>}, {transform_indices = @transform_2, window_bounds = array<i64: 1, 36, 512>}, {transform_indices = @transform_3, window_bounds = array<i64: 1, 36, 512>}, {transform_indices = @transform_4, window_bounds = array<i64: 1, 36, 512>}, {transform_indices = @transform_5, window_bounds = array<i64: 1, 8, 512>}]} {
    %c0_i32 = arith.constant 0 : i32
    %0 = arith.cmpi eq, %arg1, %c0_i32 : i32
    %1 = arith.extui %0 : i1 to i32
    %c0_i32_0 = arith.constant 0 : i32
    %2 = arith.cmpi ne, %1, %c0_i32_0 : i32
    scf.if %2 {
      %cst_29 = arith.constant 0.000000e+00 : f32
      %41 = vector.broadcast %cst_29 : f32 to vector<8x512xf32>
      %c0_30 = arith.constant 0 : index
      %c0_31 = arith.constant 0 : index
      %42 = vector.load %arg8[%c0_30, %c0_31] : memref<8x512xf32, #tpu.memory_space<vmem>>, vector<8x512xf32>
      tpu.vector_store %arg8[%c0_30, %c0_31], %41 {strides = array<i32>} : memref<8x512xf32, #tpu.memory_space<vmem>>, vector<8x512xf32>,
    } else {
    }
    %c0 = arith.constant 0 : index
    %c0_1 = arith.constant 0 : index
    %c0_2 = arith.constant 0 : index
    %3 = vector.load %arg2[%c0, %c0_1, %c0_2] : memref<3x16x36xbf16, #tpu.memory_space<vmem>>, vector<1x16x36xbf16>
    %4 = vector.shape_cast %3 : vector<1x16x36xbf16> to vector<16x36xbf16>
    %c0_3 = arith.constant 0 : index
    %c0_4 = arith.constant 0 : index
    %c0_5 = arith.constant 0 : index
    %5 = vector.load %arg4[%c0_3, %c0_4, %c0_5] : memref<1x36x512xbf16, #tpu.memory_space<vmem>>, vector<1x36x512xbf16>
    %6 = vector.shape_cast %5 : vector<1x36x512xbf16> to vector<36x512xbf16>
    %cst = arith.constant dense<0.000000e+00> : vector<16x512xf32>
    %7 = tpu.matmul %4, %6, %cst {dimension_numbers = #tpu.dot_dimension_numbers<[1], [0], [0], [1], [0, 0, 1, 1], [], []>} : vector<16x36xbf16>, vector<36x512xbf16>, vector<16x512xf32> -> vector<16x512xf32>
    %c1 = arith.constant 1 : index
    %c0_6 = arith.constant 0 : index
    %c0_7 = arith.constant 0 : index
    %8 = vector.load %arg2[%c1, %c0_6, %c0_7] : memref<3x16x36xbf16, #tpu.memory_space<vmem>>, vector<1x16x36xbf16>
    %9 = vector.shape_cast %8 : vector<1x16x36xbf16> to vector<16x36xbf16>
    %c0_8 = arith.constant 0 : index
    %c0_9 = arith.constant 0 : index
    %c0_10 = arith.constant 0 : index
    %10 = vector.load %arg5[%c0_8, %c0_9, %c0_10] : memref<1x36x512xbf16, #tpu.memory_space<vmem>>, vector<1x36x512xbf16>
    %11 = vector.shape_cast %10 : vector<1x36x512xbf16> to vector<36x512xbf16>
    %cst_11 = arith.constant dense<0.000000e+00> : vector<16x512xf32>
    %12 = tpu.matmul %9, %11, %cst_11 {dimension_numbers = #tpu.dot_dimension_numbers<[1], [0], [0], [1], [0, 0, 1, 1], [], []>} : vector<16x36xbf16>, vector<36x512xbf16>, vector<16x512xf32> -> vector<16x512xf32>
    %13 = arith.addf %7, %12 : vector<16x512xf32>
    %c2 = arith.constant 2 : index
    %c0_12 = arith.constant 0 : index
    %c0_13 = arith.constant 0 : index
    %14 = vector.load %arg2[%c2, %c0_12, %c0_13] : memref<3x16x36xbf16, #tpu.memory_space<vmem>>, vector<1x16x36xbf16>
    %15 = vector.shape_cast %14 : vector<1x16x36xbf16> to vector<16x36xbf16>
    %c0_14 = arith.constant 0 : index
    %c0_15 = arith.constant 0 : index
    %c0_16 = arith.constant 0 : index
    %16 = vector.load %arg6[%c0_14, %c0_15, %c0_16] : memref<1x36x512xbf16, #tpu.memory_space<vmem>>, vector<1x36x512xbf16>
    %17 = vector.shape_cast %16 : vector<1x36x512xbf16> to vector<36x512xbf16>
    %cst_17 = arith.constant dense<0.000000e+00> : vector<16x512xf32>
    %18 = tpu.matmul %15, %17, %cst_17 {dimension_numbers = #tpu.dot_dimension_numbers<[1], [0], [0], [1], [0, 0, 1, 1], [], []>} : vector<16x36xbf16>, vector<36x512xbf16>, vector<16x512xf32> -> vector<16x512xf32>
    %19 = arith.addf %13, %18 : vector<16x512xf32>
    %c0_18 = arith.constant 0 : index
    %c0_19 = arith.constant 0 : index
    %20 = vector.load %arg3[%c0_18, %c0_19] : memref<16x1xf32, #tpu.memory_space<vmem>>, vector<16x1xf32>
    %21 = vector.broadcast %20 : vector<16x1xf32> to vector<16x512xf32>
    %22 = arith.addf %19, %21 : vector<16x512xf32>
    %23 = vector.extract_strided_slice %22 {offsets = [0, 0], sizes = [8, 512], strides = [1, 1]} : vector<16x512xf32> to vector<8x512xf32>
    %24 = math.tanh %23 : vector<8x512xf32>
    %25 = vector.extract_strided_slice %22 {offsets = [8, 0], sizes = [8, 512], strides = [1, 1]} : vector<16x512xf32> to vector<8x512xf32>
    %26 = arith.negf %25 : vector<8x512xf32>
    %27 = math.exp %26 : vector<8x512xf32>
    %cst_20 = arith.constant 1.000000e+00 : f32
    %28 = vector.broadcast %cst_20 : f32 to vector<8x512xf32>
    %29 = arith.addf %28, %27 : vector<8x512xf32>
    %30 = arith.divf %28, %29 : vector<8x512xf32>
    %c0_21 = arith.constant 0 : index
    %c0_22 = arith.constant 0 : index
    %31 = vector.load %arg8[%c0_21, %c0_22] : memref<8x512xf32, #tpu.memory_space<vmem>>, vector<8x512xf32>
    %32 = arith.mulf %30, %31 : vector<8x512xf32>
    %cst_23 = arith.constant 1.000000e+00 : f32
    %33 = vector.broadcast %cst_23 : f32 to vector<8x512xf32>
    %34 = arith.subf %33, %30 : vector<8x512xf32>
    %35 = arith.mulf %34, %24 : vector<8x512xf32>
    %36 = arith.addf %32, %35 : vector<8x512xf32>
    %c0_24 = arith.constant 0 : index
    %c0_25 = arith.constant 0 : index
    %37 = vector.load %arg8[%c0_24, %c0_25] : memref<8x512xf32, #tpu.memory_space<vmem>>, vector<8x512xf32>
    tpu.vector_store %arg8[%c0_24, %c0_25], %36 {strides = array<i32>} : memref<8x512xf32, #tpu.memory_space<vmem>>, vector<8x512xf32>,
    %c0_26 = arith.constant 0 : index
    %c0_27 = arith.constant 0 : index
    %c0_28 = arith.constant 0 : index
    %38 = vector.load %arg7[%c0_26, %c0_27, %c0_28] : memref<1x8x512xf32, #tpu.memory_space<vmem>>, vector<1x8x512xf32>
    %39 = vector.shape_cast %38 : vector<1x8x512xf32> to vector<8x512xf32>
    %40 = vector.shape_cast %36 : vector<8x512xf32> to vector<1x8x512xf32>
    tpu.vector_store %arg7[%c0_26, %c0_27, %c0_28], %40 {strides = array<i32>} : memref<1x8x512xf32, #tpu.memory_space<vmem>>, vector<1x8x512xf32>,
    return
  }
  func.func @transform_0(%arg0: i32, %arg1: i32) -> (i32, i32, i32) {
    %c0_i32 = arith.constant 0 : i32
    %c0_i32_0 = arith.constant 0 : i32
    %c0_i32_1 = arith.constant 0 : i32
    %c0_i32_2 = arith.constant 0 : i32
    return %c0_i32, %c0_i32_0, %c0_i32_1 : i32, i32, i32
  }
  func.func @transform_1(%arg0: i32, %arg1: i32) -> (i32, i32) {
    %c0_i32 = arith.constant 0 : i32
    %c0_i32_0 = arith.constant 0 : i32
    %c0_i32_1 = arith.constant 0 : i32
    return %c0_i32, %c0_i32_0 : i32, i32
  }
  func.func @transform_2(%arg0: i32, %arg1: i32) -> (i32, i32, i32) {
    %c1_i32 = arith.constant 1 : i32
    %0 = arith.muli %arg1, %c1_i32 : i32
    %c0_i32 = arith.constant 0 : i32
    %1 = arith.addi %0, %c0_i32 : i32
    %c0_i32_0 = arith.constant 0 : i32
    %c0_i32_1 = arith.constant 0 : i32
    return %1, %c0_i32_0, %arg0 : i32, i32, i32
  }
  func.func @transform_3(%arg0: i32, %arg1: i32) -> (i32, i32, i32) {
    %c1_i32 = arith.constant 1 : i32
    %0 = arith.muli %arg1, %c1_i32 : i32
    %c1_i32_0 = arith.constant 1 : i32
    %1 = arith.addi %0, %c1_i32_0 : i32
    %c0_i32 = arith.constant 0 : i32
    %c0_i32_1 = arith.constant 0 : i32
    return %1, %c0_i32, %arg0 : i32, i32, i32
  }
  func.func @transform_4(%arg0: i32, %arg1: i32) -> (i32, i32, i32) {
    %c1_i32 = arith.constant 1 : i32
    %0 = arith.muli %arg1, %c1_i32 : i32
    %c2_i32 = arith.constant 2 : i32
    %1 = arith.addi %0, %c2_i32 : i32
    %c0_i32 = arith.constant 0 : i32
    %c0_i32_0 = arith.constant 0 : i32
    return %1, %c0_i32, %arg0 : i32, i32, i32
  }
  func.func @transform_5(%arg0: i32, %arg1: i32) -> (i32, i32, i32) {
    %c0_i32 = arith.constant 0 : i32
    %c0_i32_0 = arith.constant 0 : i32
    return %arg1, %c0_i32, %arg0 : i32, i32, i32
  }
}

</mosaic_0001>

<llo_original>
// kernel: qrnn_conv3d_layer.1
$region0: #{qrnn_conv3d_layer.1}
  #allocation0 [shape = 'u32[]', space=smem, size = 0x4, offset = 0x4, fixed_abs, tag = 'smem constant byte address 0x4 - core index']
  #allocation1 [shape = 'u32[72,128]{1,0:T(1,128)}', space=vmem, size = 0x9000, scoped, tag = 'internal scratch']
  #allocation2 [shape = 'f32[8,512]{1,0:T(8,128)}', space=vmem, size = 0x4000, scoped, tag = 'scratch operand']
  %s0 = inlined_call_operand.vmem [shape: bf16[3,16,36], index: 0, kind: input, shape index: {}]
  %s1 = inlined_call_operand.vmem [shape: f32[16,1], index: 1, kind: input, shape index: {}]
  %s2 = inlined_call_operand.vmem [shape: bf16[10,36,512], index: 2, kind: input, shape index: {}, may-alias: {2,3,4}]
  %s3 = inlined_call_operand.vmem [shape: bf16[10,36,512], index: 3, kind: input, shape index: {}, may-alias: {2,3,4}]
  %s4 = inlined_call_operand.vmem [shape: bf16[10,36,512], index: 4, kind: input, shape index: {}, may-alias: {2,3,4}]
  %s5 = inlined_call_operand.vmem [shape: f32[8,8,512], index: 5, kind: output, shape index: {}]
  %s6 = sld [smem:[#allocation0]]
  $region57: #{qrnn_conv3d_layer.1} parent=0
    _
  %s8 = ssub.s32 1, %s6
  %s9 = scalar_select 0, %s8, %s6
  loop: start=0, step=1, limit=10
  $region2: #{qrnn_conv3d_layer.1} parent=0 // loop_pre_header
    _
  $region3: #{qrnn_conv3d_layer.1} parent=0 // loop_header
    %s11 = sphi 0, %s15
    %p12 = scmp.ge.s32.totalorder %s11, 10
    %s18 = sphi 0, %s30
    %s19 = sphi 0, %s26
    %s20 = sphi 0, %s18
    %s21 = sphi 0, %s19
    %s22 = sphi 0, %s20
    %s23 = sphi 0, %s21
    %s31 = sphi 0, %s31
    %s33 = sphi 0, %s31
    %s34 = sphi 0, %s33
    %s48 = sphi 0, %s34
    %s52 = sphi 0, %s52
    %s54 = sphi 0, %s52
    %s55 = sphi 0, %s54
    %s69 = sphi 0, %s55
    %s77 = sphi 0, %s79
    %s80 = sphi 0, %s77
    %s81 = sphi 0, %s80
    %s97 = sphi 0, %s81
    %s107 = sphi 0, %s109
    %s110 = sphi 0, %s107
    %s111 = sphi 0, %s110
    %s127 = sphi 0, %s111
    %s137 = sphi 0, %s139
    %s140 = sphi 0, %s137
    %s141 = sphi 0, %s140
    %s157 = sphi 0, %s141
    %s165 = sphi 0, %s167
    %s168 = sphi 0, %s165
    %s169 = sphi 0, %s168
    %s185 = sphi 0, %s169
  $region4: #{qrnn_conv3d_layer.1} parent=0 // loop_header_branch
    %14 = sbr.rel (%p12) target = $region8
  $region5: #{qrnn_conv3d_layer.1} parent=0 // loop_body
    %s16 = ssub.s32 %s11, 1
    %s17 = ssub.s32 %s11, 2
    %s24 = sadd.s32 1, %s19
    %p25 = scmp.ge.s32.totalorder %s24, 8
    %s26 = scalar_select %p25, 0, %s24
    %s27 = sadd.s32 1, %s18
    %s28 = scalar_select %p25, %s27, %s18
    %p29 = scmp.ge.s32.totalorder %s28, 1
    %s30 = scalar_select %p29, 0, %s28
    %s32 = sadd.s32 %s31, 1
    %p35 = scmp.eq.s32.totalorder %s11, 7
    %p36 = scmp.ne.s32.totalorder %s31, %s33
    %p37 = scmp.eq.s32.totalorder %s11, 0
    %p38 = por %p36, %p37
    %p39 = scmp.ne.s32.totalorder %s31, %s33
    %p40 = scmp.eq.s32.totalorder %s16, 7
    %p41 = por %p39, %p40
    %p42 = scmp.ne.s32.totalorder %s33, %s34
    %p43 = scmp.eq.s32.totalorder %s16, 0
    %p44 = por %p42, %p43
    %p45 = scmp.ne.s32.totalorder %s33, %s34
    %p46 = scmp.eq.s32.totalorder %s17, 7
    %p47 = por %p45, %p46
    %p49 = scmp.ne.s32.totalorder %s34, %s48
    %p50 = scmp.eq.s32.totalorder %s17, 0
    %p51 = por %p49, %p50
    %s53 = sadd.s32 %s52, 1
    %p56 = scmp.eq.s32.totalorder %s11, 7
    %p57 = scmp.ne.s32.totalorder %s52, %s54
    %p58 = scmp.eq.s32.totalorder %s11, 0
    %p59 = por %p57, %p58
    %p60 = scmp.ne.s32.totalorder %s52, %s54
    %p61 = scmp.eq.s32.totalorder %s16, 7
    %p62 = por %p60, %p61
    %p63 = scmp.ne.s32.totalorder %s54, %s55
    %p64 = scmp.eq.s32.totalorder %s16, 0
    %p65 = por %p63, %p64
    %p66 = scmp.ne.s32.totalorder %s54, %s55
    %p67 = scmp.eq.s32.totalorder %s17, 7
    %p68 = por %p66, %p67
    %p70 = scmp.ne.s32.totalorder %s55, %s69
    %p71 = scmp.eq.s32.totalorder %s17, 0
    %p72 = por %p70, %p71
    %s73 = ssub.s32 %s19, %s26
    %s74 = ssub.s32 %s18, %s30
    %s75 = sor.u32 %s73, %s74
    %p76 = scmp.eq.s32.totalorder %s75, 0
    %s78 = sadd.s32 %s77, 1
    %s79 = scalar_select %p76, %s77, %s78
    %p82 = pneg %p76
    %p83 = scmp.eq.s32.totalorder %s11, 7
    %p84 = por %p82, %p83
    %p85 = scmp.ne.s32.totalorder %s77, %s80
    %p86 = scmp.eq.s32.totalorder %s11, 0
    %p87 = por %p85, %p86
    %p88 = scmp.ne.s32.totalorder %s77, %s80
    %p89 = scmp.eq.s32.totalorder %s16, 7
    %p90 = por %p88, %p89
    %p91 = scmp.ne.s32.totalorder %s80, %s81
    %p92 = scmp.eq.s32.totalorder %s16, 0
    %p93 = por %p91, %p92
    %p94 = scmp.ne.s32.totalorder %s80, %s81
    %p95 = scmp.eq.s32.totalorder %s17, 7
    %p96 = por %p94, %p95
    %p98 = scmp.ne.s32.totalorder %s81, %s97
    %p99 = scmp.eq.s32.totalorder %s17, 0
    %p100 = por %p98, %p99
    %s101 = sadd.s32 %s19, 1
    %s102 = sadd.s32 %s26, 1
    %s103 = ssub.s32 %s101, %s102
    %s104 = ssub.s32 %s18, %s30
    %s105 = sor.u32 %s103, %s104
    %p106 = scmp.eq.s32.totalorder %s105, 0
    %s108 = sadd.s32 %s107, 1
    %s109 = scalar_select %p106, %s107, %s108
    %p112 = pneg %p106
    %p113 = scmp.eq.s32.totalorder %s11, 7
    %p114 = por %p112, %p113
    %p115 = scmp.ne.s32.totalorder %s107, %s110
    %p116 = scmp.eq.s32.totalorder %s11, 0
    %p117 = por %p115, %p116
    %p118 = scmp.ne.s32.totalorder %s107, %s110
    %p119 = scmp.eq.s32.totalorder %s16, 7
    %p120 = por %p118, %p119
    %p121 = scmp.ne.s32.totalorder %s110, %s111
    %p122 = scmp.eq.s32.totalorder %s16, 0
    %p123 = por %p121, %p122
    %p124 = scmp.ne.s32.totalorder %s110, %s111
    %p125 = scmp.eq.s32.totalorder %s17, 7
    %p126 = por %p124, %p125
    %p128 = scmp.ne.s32.totalorder %s111, %s127
    %p129 = scmp.eq.s32.totalorder %s17, 0
    %p130 = por %p128, %p129
    %s131 = sadd.s32 %s19, 2
    %s132 = sadd.s32 %s26, 2
    %s133 = ssub.s32 %s131, %s132
    %s134 = ssub.s32 %s18, %s30
    %s135 = sor.u32 %s133, %s134
    %p136 = scmp.eq.s32.totalorder %s135, 0
    %s138 = sadd.s32 %s137, 1
    %s139 = scalar_select %p136, %s137, %s138
    %p142 = pneg %p136
    %p143 = scmp.eq.s32.totalorder %s11, 7
    %p144 = por %p142, %p143
    %p145 = scmp.ne.s32.totalorder %s137, %s140
    %p146 = scmp.eq.s32.totalorder %s11, 0
    %p147 = por %p145, %p146
    %p148 = scmp.ne.s32.totalorder %s137, %s140
    %p149 = scmp.eq.s32.totalorder %s16, 7
    %p150 = por %p148, %p149
    %p151 = scmp.ne.s32.totalorder %s140, %s141
    %p152 = scmp.eq.s32.totalorder %s16, 0
    %p153 = por %p151, %p152
    %p154 = scmp.ne.s32.totalorder %s140, %s141
    %p155 = scmp.eq.s32.totalorder %s17, 7
    %p156 = por %p154, %p155
    %p158 = scmp.ne.s32.totalorder %s141, %s157
    %p159 = scmp.eq.s32.totalorder %s17, 0
    %p160 = por %p158, %p159
    %s161 = ssub.s32 %s19, %s26
    %s162 = ssub.s32 %s18, %s30
    %s163 = sor.u32 %s161, %s162
    %p164 = scmp.eq.s32.totalorder %s163, 0
    %s166 = sadd.s32 %s165, 1
    %s167 = scalar_select %p164, %s165, %s166
    %p170 = pneg %p164
    %p171 = scmp.eq.s32.totalorder %s11, 7
    %p172 = por %p170, %p171
    %p173 = scmp.ne.s32.totalorder %s165, %s168
    %p174 = scmp.eq.s32.totalorder %s11, 0
    %p175 = por %p173, %p174
    %p176 = scmp.ne.s32.totalorder %s165, %s168
    %p177 = scmp.eq.s32.totalorder %s16, 7
    %p178 = por %p176, %p177
    %p179 = scmp.ne.s32.totalorder %s168, %s169
    %p180 = scmp.eq.s32.totalorder %s16, 0
    %p181 = por %p179, %p180
    %p182 = scmp.ne.s32.totalorder %s168, %s169
    %p183 = scmp.eq.s32.totalorder %s17, 7
    %p184 = por %p182, %p183
    %p186 = scmp.ne.s32.totalorder %s169, %s185
    %p187 = scmp.eq.s32.totalorder %s17, 0
    %p188 = por %p186, %p187
    %p189 = scmp.le.s32.totalorder 1, %s11
    %p190 = scmp.lt.s32.totalorder %s11, 9
    %p191 = pnand %p189, %p190
    %p192 = pneg %p191
    // Predicated region
    $region9: #{qrnn_conv3d_layer.1} parent=5 // pred_check
      _
    $region10: #{qrnn_conv3d_layer.1} parent=5 // pred_check_branch
      %194 = sbr.rel (%p191) target = $region12
    $region11: #{qrnn_conv3d_layer.1} parent=5 // pred_region
      %s195 = ssub.s32 %s11, 1
      // Predicated region
      $region13: #{qrnn_conv3d_layer.1} parent=11 // pred_check
        %p196 = pneg %p44
      $region14: #{qrnn_conv3d_layer.1} parent=11 // pred_check_branch
        %198 = sbr.rel (%p196) target = $region16
      $region15: #{qrnn_conv3d_layer.1} parent=11 // pred_region
        _
      $region16: #{qrnn_conv3d_layer.1} parent=11 // pred_fallthru
        _
      // Predicated region
      $region17: #{qrnn_conv3d_layer.1} parent=11 // pred_check
        %p199 = pneg %p65
      $region18: #{qrnn_conv3d_layer.1} parent=11 // pred_check_branch
        %201 = sbr.rel (%p199) target = $region20
      $region19: #{qrnn_conv3d_layer.1} parent=11 // pred_region
        _
      $region20: #{qrnn_conv3d_layer.1} parent=11 // pred_fallthru
        _
    $region12: #{qrnn_conv3d_layer.1} parent=5 // pred_fallthru
      _
    %p202 = scmp.lt.s32.totalorder %s11, 8
    // Predicated region
    $region21: #{qrnn_conv3d_layer.1} parent=5 // pred_check
      %p203 = pneg %p202
    $region22: #{qrnn_conv3d_layer.1} parent=5 // pred_check_branch
      %205 = sbr.rel (%p203) target = $region24
    $region23: #{qrnn_conv3d_layer.1} parent=5 // pred_region
      // Predicated region
      $region25: #{qrnn_conv3d_layer.1} parent=23 // pred_check
        %p206 = pneg %p87
      $region26: #{qrnn_conv3d_layer.1} parent=23 // pred_check_branch
        %208 = sbr.rel (%p206) target = $region28
      $region27: #{qrnn_conv3d_layer.1} parent=23 // pred_region
        %s209 = smul.u32 4, %s18
        %p210 = scmp.lt.s32.totalorder %s19, 9
        %s211 = scalar_select %p210, %s19, 9
        %p212 = scmp.lt.s32.totalorder %s209, 3
        %s213 = scalar_select %p212, %s209, 3
        %s214 = smul.addr %s211, 20
        %s215 = sadd.s32 %s213, %s214
        %s216 = smul.addr %s215, 4
        %s217 = scalar_lea.vmem %s2, %s216
        %s218 = smul.u32 4, %s18
      $region28: #{qrnn_conv3d_layer.1} parent=23 // pred_fallthru
        _
      // Predicated region
      $region29: #{qrnn_conv3d_layer.1} parent=23 // pred_check
        %p219 = pneg %p117
      $region30: #{qrnn_conv3d_layer.1} parent=23 // pred_check_branch
        %221 = sbr.rel (%p219) target = $region32
      $region31: #{qrnn_conv3d_layer.1} parent=23 // pred_region
        %s222 = sadd.s32 %s19, 1
        %s223 = smul.u32 4, %s18
        %p224 = scmp.lt.s32.totalorder %s222, 9
        %s225 = scalar_select %p224, %s222, 9
        %p226 = scmp.lt.s32.totalorder %s223, 3
        %s227 = scalar_select %p226, %s223, 3
        %s228 = smul.addr %s225, 20
        %s229 = sadd.s32 %s227, %s228
        %s230 = smul.addr %s229, 4
        %s231 = scalar_lea.vmem %s3, %s230
        %s232 = sadd.s32 %s19, 1
        %s233 = smul.u32 4, %s18
      $region32: #{qrnn_conv3d_layer.1} parent=23 // pred_fallthru
        _
      // Predicated region
      $region33: #{qrnn_conv3d_layer.1} parent=23 // pred_check
        %p234 = pneg %p147
      $region34: #{qrnn_conv3d_layer.1} parent=23 // pred_check_branch
        %236 = sbr.rel (%p234) target = $region36
      $region35: #{qrnn_conv3d_layer.1} parent=23 // pred_region
        %s237 = sadd.s32 %s19, 2
        %s238 = smul.u32 4, %s18
        %p239 = scmp.lt.s32.totalorder %s237, 9
        %s240 = scalar_select %p239, %s237, 9
        %p241 = scmp.lt.s32.totalorder %s238, 3
        %s242 = scalar_select %p241, %s238, 3
        %s243 = smul.addr %s240, 20
        %s244 = sadd.s32 %s242, %s243
        %s245 = smul.addr %s244, 4
        %s246 = scalar_lea.vmem %s4, %s245
        %s247 = sadd.s32 %s19, 2
        %s248 = smul.u32 4, %s18
      $region36: #{qrnn_conv3d_layer.1} parent=23 // pred_fallthru
        _
    $region24: #{qrnn_conv3d_layer.1} parent=5 // pred_fallthru
      _
    %p249 = scmp.le.s32.totalorder 1, %s11
    %p250 = scmp.lt.s32.totalorder %s11, 9
    %p251 = pnand %p249, %p250
    %p252 = pneg %p251
    // Predicated region
    $region37: #{qrnn_conv3d_layer.1} parent=5 // pred_check
      _
    $region38: #{qrnn_conv3d_layer.1} parent=5 // pred_check_branch
      %254 = sbr.rel (%p251) target = $region40
    $region39: #{qrnn_conv3d_layer.1} parent=5 // pred_region
      %s255 = ssub.s32 %s11, 1
      %p256 = pneg %p44
      %p257 = pneg %p41
      %p258 = pneg %p65
      %p259 = pneg %p62
      %s260 = smul.u32 4, %s20
      %p261 = scmp.lt.s32.totalorder %s21, 9
      %s262 = scalar_select %p261, %s21, 9
      %p263 = scmp.lt.s32.totalorder %s260, 3
      %s264 = scalar_select %p263, %s260, 3
      %s265 = smul.addr %s262, 20
      %s266 = sadd.s32 %s264, %s265
      %s267 = smul.addr %s266, 4
      %s268 = scalar_lea.vmem %s2, %s267
      %p269 = pneg %p93
      %p270 = pneg %p90
      %s271 = sadd.s32 %s21, 1
      %s272 = smul.u32 4, %s20
      %p273 = scmp.lt.s32.totalorder %s271, 9
      %s274 = scalar_select %p273, %s271, 9
      %p275 = scmp.lt.s32.totalorder %s272, 3
      %s276 = scalar_select %p275, %s272, 3
      %s277 = smul.addr %s274, 20
      %s278 = sadd.s32 %s276, %s277
      %s279 = smul.addr %s278, 4
      %s280 = scalar_lea.vmem %s3, %s279
      %p281 = pneg %p123
      %p282 = pneg %p120
      %s283 = sadd.s32 %s21, 2
      %s284 = smul.u32 4, %s20
      %p285 = scmp.lt.s32.totalorder %s283, 9
      %s286 = scalar_select %p285, %s283, 9
      %p287 = scmp.lt.s32.totalorder %s284, 3
      %s288 = scalar_select %p287, %s284, 3
      %s289 = smul.addr %s286, 20
      %s290 = sadd.s32 %s288, %s289
      %s291 = smul.addr %s290, 4
      %s292 = scalar_lea.vmem %s4, %s291
      %p293 = pneg %p153
      %p294 = pneg %p150
      %p295 = pneg %p181
      %p296 = pneg %p178
      %s297 = smul.u32 4, %s20
      %p298 = scmp.lt.s32.totalorder %s21, 7
      %s299 = scalar_select %p298, %s21, 7
      %p300 = scmp.lt.s32.totalorder %s297, 3
      %s301 = scalar_select %p300, %s297, 3
      %s302 = smul.addr %s299, 4
      %s303 = sadd.s32 %s301, %s302
      %s304 = smul.addr %s303, 8
      %s305 = scalar_lea.vmem %s5, %s304
      %s306 = smul.u32 4, %s20
      %p307 = scmp.lt.s32.totalorder %s21, 9
      %s308 = scalar_select %p307, %s21, 9
      %p309 = scmp.lt.s32.totalorder %s306, 3
      %s310 = scalar_select %p309, %s306, 3
      %s311 = smul.addr %s308, 20
      %s312 = sadd.s32 %s310, %s311
      %s313 = smul.addr %s312, 4
      %s314 = scalar_lea.vmem %s2, %s313
      %s315 = smul.u32 4, %s20
      %s316 = sadd.s32 %s21, 1
      %s317 = smul.u32 4, %s20
      %p318 = scmp.lt.s32.totalorder %s316, 9
      %s319 = scalar_select %p318, %s316, 9
      %p320 = scmp.lt.s32.totalorder %s317, 3
      %s321 = scalar_select %p320, %s317, 3
      %s322 = smul.addr %s319, 20
      %s323 = sadd.s32 %s321, %s322
      %s324 = smul.addr %s323, 4
      %s325 = scalar_lea.vmem %s3, %s324
      %s326 = sadd.s32 %s21, 1
      %s327 = smul.u32 4, %s20
      %s328 = sadd.s32 %s21, 2
      %s329 = smul.u32 4, %s20
      %p330 = scmp.lt.s32.totalorder %s328, 9
      %s331 = scalar_select %p330, %s328, 9
      %p332 = scmp.lt.s32.totalorder %s329, 3
      %s333 = scalar_select %p332, %s329, 3
      %s334 = smul.addr %s331, 20
      %s335 = sadd.s32 %s333, %s334
      %s336 = smul.addr %s335, 4
      %s337 = scalar_lea.vmem %s4, %s336
      %s338 = sadd.s32 %s21, 2
      %s339 = smul.u32 4, %s20
      %s340 = smul.u32 4, %s20
      %p341 = scmp.lt.s32.totalorder %s21, 7
      %s342 = scalar_select %p341, %s21, 7
      %p343 = scmp.lt.s32.totalorder %s340, 3
      %s344 = scalar_select %p343, %s340, 3
      %s345 = smul.addr %s342, 4
      %s346 = sadd.s32 %s344, %s345
      %s347 = smul.addr %s346, 8
      %s348 = scalar_lea.vmem %s5, %s347
      %s349 = smul.u32 4, %s20
      %p351 = scmp.eq.s32.totalorder %s21, 0
      // Predicated region
      $region41: #{qrnn_conv3d_layer.1} parent=39 // pred_check
        %p352 = pneg %p351
      $region42: #{qrnn_conv3d_layer.1} parent=39 // pred_check_branch
        %354 = sbr.rel (%p352) target = $region44
      $region43: #{qrnn_conv3d_layer.1} parent=39 // pred_region
        %355 = vst [vmem:[#allocation2] sm:$0xff] 0.0
        %356 = vst [vmem:[#allocation2 + $0x8] sm:$0xff] 0.0
        %357 = vst [vmem:[#allocation2 + $0x10] sm:$0xff] 0.0
        %358 = vst [vmem:[#allocation2 + $0x18] sm:$0xff] 0.0
      $region44: #{qrnn_conv3d_layer.1} parent=39 // pred_fallthru
        _
      %v359 = vld [vmem:[%s0] sm:$0xf]
      %v360 = vld [vmem:[%s0 + $0x4] sm:$0xf]
      %v361 = vld [vmem:[%s314] sm:$0xff]
      %v362 = vld [vmem:[%s314 + $0x8] sm:$0xff]
      %v363 = vld [vmem:[%s314 + $0x10] sm:$0xff]
      %v364 = vld [vmem:[%s314 + $0x18] sm:$0xff]
      %v365 = vld [vmem:[%s314 + $0x20] sm:$0xff]
      %v366 = vld [vmem:[%s314 + $0x28] sm:$0xff]
      %v367 = vld [vmem:[%s314 + $0x30] sm:$0xff]
      %v368 = vld [vmem:[%s314 + $0x38] sm:$0xff]
      %v369 = vld [vmem:[%s314 + $0x40] sm:$0x33]
      %v370 = vld [vmem:[%s314 + $0x48] sm:$0x33]
      %s371 = scalar_lea.vmem %s0, 8
      %v372 = vld [vmem:[%s371] sm:$0xf]
      %v373 = vld [vmem:[%s371 + $0x4] sm:$0xf]
      %v374 = vld [vmem:[%s325] sm:$0xff]
      %v375 = vld [vmem:[%s325 + $0x8] sm:$0xff]
      %v376 = vld [vmem:[%s325 + $0x10] sm:$0xff]
      %v377 = vld [vmem:[%s325 + $0x18] sm:$0xff]
      %v378 = vld [vmem:[%s325 + $0x20] sm:$0xff]
      %v379 = vld [vmem:[%s325 + $0x28] sm:$0xff]
      %v380 = vld [vmem:[%s325 + $0x30] sm:$0xff]
      %v381 = vld [vmem:[%s325 + $0x38] sm:$0xff]
      %v382 = vld [vmem:[%s325 + $0x40] sm:$0x33]
      %v383 = vld [vmem:[%s325 + $0x48] sm:$0x33]
      %v386 = vunpack.c.l.b16 %v372
      %v387 = vunpack.c.l.b16 %v373
      %v388 = vpack.c.b16 %v387, %v386
      %v399 = vunpack.c.l.b16 %v374
      %v400 = vunpack.c.h.b16 %v374
      %v401 = vunpack.c.l.b16 %v375
      %v402 = vunpack.c.h.b16 %v375
      %v403 = vunpack.c.l.b16 %v376
      %v404 = vunpack.c.h.b16 %v376
      %v405 = vunpack.c.l.b16 %v377
      %v406 = vunpack.c.h.b16 %v377
      %v407 = vunpack.c.l.b16 %v378
      %v408 = vunpack.c.h.b16 %v378
      %v409 = vunpack.c.l.b16 %v379
      %v410 = vunpack.c.h.b16 %v379
      %v411 = vunpack.c.l.b16 %v380
      %v412 = vunpack.c.h.b16 %v380
      %v413 = vunpack.c.l.b16 %v381
      %v414 = vunpack.c.h.b16 %v381
      %v415 = vunpack.c.l.b16 %v382
      %v416 = vunpack.c.h.b16 %v382
      %v417 = vunpack.c.l.b16 %v383
      %v418 = vunpack.c.h.b16 %v383
      %v419 = vpack.c.b16 %v403, %v399
      %v420 = vpack.c.b16 %v404, %v400
      %v421 = vpack.c.b16 %v405, %v401
      %v422 = vpack.c.b16 %v406, %v402
      %v423 = vpack.c.b16 %v411, %v407
      %v424 = vpack.c.b16 %v412, %v408
      %v425 = vpack.c.b16 %v413, %v409
      %v426 = vpack.c.b16 %v414, %v410
      %v427 = vpack.c.b16 %v415, %v415
      %v428 = vpack.c.b16 %v416, %v416
      %v429 = vpack.c.b16 %v417, %v417
      %v430 = vpack.c.b16 %v418, %v418
      %vm439 = vcmask 293888
      %v441 = vsel %vm439, %v388, 0
      %vm443 = vcmask 1041408
      %v445 = vsel %vm443, %v427, 0
      %v448 = vsel %vm443, %v428, 0
      %v451 = vsel %vm443, %v429, 0
      %v454 = vsel %vm443, %v430, 0
      %456 = vmatpush.bf16.msra.mxu0 0
      %457 = vmatpush.bf16.msra.mxu0 0
      %458 = vmatpush.bf16.msra.mxu0 0
      %459 = vmatpush.bf16.msra.mxu0 0
      %460 = vmatpush.bf16.msra.mxu0 0
      %461 = vmatpush.bf16.msra.mxu0 %v445
      %462 = vmatpush.bf16.msra.mxu0 %v423
      %463 = vmatpush.bf16.msra.mxu0 %v419
      %464 = vmatmul.bf16.gmra.mxu0 %v441
      %v465 = vpop.f32.mrf.mxu0
      %v466 = vadd.f32 0.0, %v465
      %v467 = vpop.f32.mrf.mxu0
      %v468 = vadd.f32 0.0, %v467
      %469 = vdwg.mxu0
      %470 = vmatpush.bf16.msra.mxu0 0
      %471 = vmatpush.bf16.msra.mxu0 0
      %472 = vmatpush.bf16.msra.mxu0 0
      %473 = vmatpush.bf16.msra.mxu0 0
      %474 = vmatpush.bf16.msra.mxu0 0
      %475 = vmatpush.bf16.msra.mxu0 %v448
      %476 = vmatpush.bf16.msra.mxu0 %v424
      %477 = vmatpush.bf16.msra.mxu0 %v420
      %478 = vmatmul.bf16.gmra.mxu0 %v441
      %v479 = vpop.f32.mrf.mxu0
      %v480 = vadd.f32 0.0, %v479
      %v481 = vpop.f32.mrf.mxu0
      %v482 = vadd.f32 0.0, %v481
      %483 = vdwg.mxu0
      %484 = vmatpush.bf16.msra.mxu0 0
      %485 = vmatpush.bf16.msra.mxu0 0
      %486 = vmatpush.bf16.msra.mxu0 0
      %487 = vmatpush.bf16.msra.mxu0 0
      %488 = vmatpush.bf16.msra.mxu0 0
      %489 = vmatpush.bf16.msra.mxu0 %v451
      %490 = vmatpush.bf16.msra.mxu0 %v425
      %491 = vmatpush.bf16.msra.mxu0 %v421
      %492 = vmatmul.bf16.gmra.mxu0 %v441
      %v493 = vpop.f32.mrf.mxu0
      %v494 = vadd.f32 0.0, %v493
      %v495 = vpop.f32.mrf.mxu0
      %v496 = vadd.f32 0.0, %v495
      %497 = vdwg.mxu0
      %498 = vmatpush.bf16.msra.mxu0 0
      %499 = vmatpush.bf16.msra.mxu0 0
      %500 = vmatpush.bf16.msra.mxu0 0
      %501 = vmatpush.bf16.msra.mxu0 0
      %502 = vmatpush.bf16.msra.mxu0 0
      %503 = vmatpush.bf16.msra.mxu0 %v454
      %504 = vmatpush.bf16.msra.mxu0 %v426
      %505 = vmatpush.bf16.msra.mxu0 %v422
      %506 = vmatmul.bf16.gmra.mxu0 %v441
      %v507 = vpop.f32.mrf.mxu0
      %v508 = vadd.f32 0.0, %v507
      %v509 = vpop.f32.mrf.mxu0
      %v510 = vadd.f32 0.0, %v509
      %511 = vdwg.mxu0
      %v514 = vunpack.c.l.b16 %v359
      %v515 = vunpack.c.l.b16 %v360
      %v516 = vpack.c.b16 %v515, %v514
      %v527 = vunpack.c.l.b16 %v361
      %v528 = vunpack.c.h.b16 %v361
      %v529 = vunpack.c.l.b16 %v362
      %v530 = vunpack.c.h.b16 %v362
      %v531 = vunpack.c.l.b16 %v363
      %v532 = vunpack.c.h.b16 %v363
      %v533 = vunpack.c.l.b16 %v364
      %v534 = vunpack.c.h.b16 %v364
      %v535 = vunpack.c.l.b16 %v365
      %v536 = vunpack.c.h.b16 %v365
      %v537 = vunpack.c.l.b16 %v366
      %v538 = vunpack.c.h.b16 %v366
      %v539 = vunpack.c.l.b16 %v367
      %v540 = vunpack.c.h.b16 %v367
      %v541 = vunpack.c.l.b16 %v368
      %v542 = vunpack.c.h.b16 %v368
      %v543 = vunpack.c.l.b16 %v369
      %v544 = vunpack.c.h.b16 %v369
      %v545 = vunpack.c.l.b16 %v370
      %v546 = vunpack.c.h.b16 %v370
      %v547 = vpack.c.b16 %v531, %v527
      %v548 = vpack.c.b16 %v532, %v528
      %v549 = vpack.c.b16 %v533, %v529
      %v550 = vpack.c.b16 %v534, %v530
      %v551 = vpack.c.b16 %v539, %v535
      %v552 = vpack.c.b16 %v540, %v536
      %v553 = vpack.c.b16 %v541, %v537
      %v554 = vpack.c.b16 %v542, %v538
      %v555 = vpack.c.b16 %v543, %v543
      %v556 = vpack.c.b16 %v544, %v544
      %v557 = vpack.c.b16 %v545, %v545
      %v558 = vpack.c.b16 %v546, %v546
      %v568 = vsel %vm439, %v516, 0
      %v571 = vsel %vm443, %v555, 0
      %v574 = vsel %vm443, %v556, 0
      %v577 = vsel %vm443, %v557, 0
      %v580 = vsel %vm443, %v558, 0
      %582 = vmatpush.bf16.msra.mxu0 0
      %583 = vmatpush.bf16.msra.mxu0 0
      %584 = vmatpush.bf16.msra.mxu0 0
      %585 = vmatpush.bf16.msra.mxu0 0
      %586 = vmatpush.bf16.msra.mxu0 0
      %587 = vmatpush.bf16.msra.mxu0 %v571
      %588 = vmatpush.bf16.msra.mxu0 %v551
      %589 = vmatpush.bf16.msra.mxu0 %v547
      %590 = vmatmul.bf16.gmra.mxu0 %v568
      %v591 = vpop.f32.mrf.mxu0
      %v592 = vadd.f32 %v466, %v591
      %v593 = vpop.f32.mrf.mxu0
      %v594 = vadd.f32 %v468, %v593
      %595 = vdwg.mxu0
      %596 = vmatpush.bf16.msra.mxu0 0
      %597 = vmatpush.bf16.msra.mxu0 0
      %598 = vmatpush.bf16.msra.mxu0 0
      %599 = vmatpush.bf16.msra.mxu0 0
      %600 = vmatpush.bf16.msra.mxu0 0
      %601 = vmatpush.bf16.msra.mxu0 %v574
      %602 = vmatpush.bf16.msra.mxu0 %v552
      %603 = vmatpush.bf16.msra.mxu0 %v548
      %604 = vmatmul.bf16.gmra.mxu0 %v568
      %v605 = vpop.f32.mrf.mxu0
      %v606 = vadd.f32 %v480, %v605
      %v607 = vpop.f32.mrf.mxu0
      %v608 = vadd.f32 %v482, %v607
      %609 = vdwg.mxu0
      %610 = vmatpush.bf16.msra.mxu0 0
      %611 = vmatpush.bf16.msra.mxu0 0
      %612 = vmatpush.bf16.msra.mxu0 0
      %613 = vmatpush.bf16.msra.mxu0 0
      %614 = vmatpush.bf16.msra.mxu0 0
      %615 = vmatpush.bf16.msra.mxu0 %v577
      %616 = vmatpush.bf16.msra.mxu0 %v553
      %617 = vmatpush.bf16.msra.mxu0 %v549
      %618 = vmatmul.bf16.gmra.mxu0 %v568
      %v619 = vpop.f32.mrf.mxu0
      %v620 = vadd.f32 %v494, %v619
      %v621 = vpop.f32.mrf.mxu0
      %v622 = vadd.f32 %v496, %v621
      %623 = vdwg.mxu0
      %624 = vmatpush.bf16.msra.mxu0 0
      %625 = vmatpush.bf16.msra.mxu0 0
      %626 = vmatpush.bf16.msra.mxu0 0
      %627 = vmatpush.bf16.msra.mxu0 0
      %628 = vmatpush.bf16.msra.mxu0 0
      %629 = vmatpush.bf16.msra.mxu0 %v580
      %630 = vmatpush.bf16.msra.mxu0 %v554
      %631 = vmatpush.bf16.msra.mxu0 %v550
      %632 = vmatmul.bf16.gmra.mxu0 %v568
      %v633 = vpop.f32.mrf.mxu0
      %v634 = vadd.f32 %v508, %v633
      %v635 = vpop.f32.mrf.mxu0
      %v636 = vadd.f32 %v510, %v635
      %637 = vdwg.mxu0
      %s638 = scalar_lea.vmem %s0, 16
      %v639 = vld [vmem:[%s638] sm:$0xf]
      %v640 = vld [vmem:[%s638 + $0x4] sm:$0xf]
      %v641 = vld [vmem:[%s337] sm:$0xff]
      %v642 = vld [vmem:[%s337 + $0x8] sm:$0xff]
      %v643 = vld [vmem:[%s337 + $0x10] sm:$0xff]
      %v644 = vld [vmem:[%s337 + $0x18] sm:$0xff]
      %v645 = vld [vmem:[%s337 + $0x20] sm:$0xff]
      %v646 = vld [vmem:[%s337 + $0x28] sm:$0xff]
      %v647 = vld [vmem:[%s337 + $0x30] sm:$0xff]
      %v648 = vld [vmem:[%s337 + $0x38] sm:$0xff]
      %v649 = vld [vmem:[%s337 + $0x40] sm:$0x33]
      %v650 = vld [vmem:[%s337 + $0x48] sm:$0x33]
      %v653 = vunpack.c.l.b16 %v639
      %v654 = vunpack.c.l.b16 %v640
      %v655 = vpack.c.b16 %v654, %v653
      %v666 = vunpack.c.l.b16 %v641
      %v667 = vunpack.c.h.b16 %v641
      %v668 = vunpack.c.l.b16 %v642
      %v669 = vunpack.c.h.b16 %v642
      %v670 = vunpack.c.l.b16 %v643
      %v671 = vunpack.c.h.b16 %v643
      %v672 = vunpack.c.l.b16 %v644
      %v673 = vunpack.c.h.b16 %v644
      %v674 = vunpack.c.l.b16 %v645
      %v675 = vunpack.c.h.b16 %v645
      %v676 = vunpack.c.l.b16 %v646
      %v677 = vunpack.c.h.b16 %v646
      %v678 = vunpack.c.l.b16 %v647
      %v679 = vunpack.c.h.b16 %v647
      %v680 = vunpack.c.l.b16 %v648
      %v681 = vunpack.c.h.b16 %v648
      %v682 = vunpack.c.l.b16 %v649
      %v683 = vunpack.c.h.b16 %v649
      %v684 = vunpack.c.l.b16 %v650
      %v685 = vunpack.c.h.b16 %v650
      %v686 = vpack.c.b16 %v670, %v666
      %v687 = vpack.c.b16 %v671, %v667
      %v688 = vpack.c.b16 %v672, %v668
      %v689 = vpack.c.b16 %v673, %v669
      %v690 = vpack.c.b16 %v678, %v674
      %v691 = vpack.c.b16 %v679, %v675
      %v692 = vpack.c.b16 %v680, %v676
      %v693 = vpack.c.b16 %v681, %v677
      %v694 = vpack.c.b16 %v682, %v682
      %v695 = vpack.c.b16 %v683, %v683
      %v696 = vpack.c.b16 %v684, %v684
      %v697 = vpack.c.b16 %v685, %v685
      %v707 = vsel %vm439, %v655, 0
      %v710 = vsel %vm443, %v694, 0
      %v713 = vsel %vm443, %v695, 0
      %v716 = vsel %vm443, %v696, 0
      %v719 = vsel %vm443, %v697, 0
      %721 = vmatpush.bf16.msra.mxu0 0
      %722 = vmatpush.bf16.msra.mxu0 0
      %723 = vmatpush.bf16.msra.mxu0 0
      %724 = vmatpush.bf16.msra.mxu0 0
      %725 = vmatpush.bf16.msra.mxu0 0
      %726 = vmatpush.bf16.msra.mxu0 %v710
      %727 = vmatpush.bf16.msra.mxu0 %v690
      %728 = vmatpush.bf16.msra.mxu0 %v686
      %729 = vmatmul.bf16.gmra.mxu0 %v707
      %v730 = vpop.f32.mrf.mxu0
      %v731 = vadd.f32 0.0, %v730
      %v732 = vpop.f32.mrf.mxu0
      %v733 = vadd.f32 0.0, %v732
      %734 = vdwg.mxu0
      %735 = vmatpush.bf16.msra.mxu0 0
      %736 = vmatpush.bf16.msra.mxu0 0
      %737 = vmatpush.bf16.msra.mxu0 0
      %738 = vmatpush.bf16.msra.mxu0 0
      %739 = vmatpush.bf16.msra.mxu0 0
      %740 = vmatpush.bf16.msra.mxu0 %v713
      %741 = vmatpush.bf16.msra.mxu0 %v691
      %742 = vmatpush.bf16.msra.mxu0 %v687
      %743 = vmatmul.bf16.gmra.mxu0 %v707
      %v744 = vpop.f32.mrf.mxu0
      %v745 = vadd.f32 0.0, %v744
      %v746 = vpop.f32.mrf.mxu0
      %v747 = vadd.f32 0.0, %v746
      %748 = vdwg.mxu0
      %749 = vmatpush.bf16.msra.mxu0 0
      %750 = vmatpush.bf16.msra.mxu0 0
      %751 = vmatpush.bf16.msra.mxu0 0
      %752 = vmatpush.bf16.msra.mxu0 0
      %753 = vmatpush.bf16.msra.mxu0 0
      %754 = vmatpush.bf16.msra.mxu0 %v716
      %755 = vmatpush.bf16.msra.mxu0 %v692
      %756 = vmatpush.bf16.msra.mxu0 %v688
      %757 = vmatmul.bf16.gmra.mxu0 %v707
      %v758 = vpop.f32.mrf.mxu0
      %v759 = vadd.f32 0.0, %v758
      %v760 = vpop.f32.mrf.mxu0
      %v761 = vadd.f32 0.0, %v760
      %762 = vdwg.mxu0
      %763 = vmatpush.bf16.msra.mxu0 0
      %764 = vmatpush.bf16.msra.mxu0 0
      %765 = vmatpush.bf16.msra.mxu0 0
      %766 = vmatpush.bf16.msra.mxu0 0
      %767 = vmatpush.bf16.msra.mxu0 0
      %768 = vmatpush.bf16.msra.mxu0 %v719
      %769 = vmatpush.bf16.msra.mxu0 %v693
      %770 = vmatpush.bf16.msra.mxu0 %v689
      %771 = vmatmul.bf16.gmra.mxu0 %v707
      %v772 = vpop.f32.mrf.mxu0
      %v773 = vadd.f32 0.0, %v772
      %v774 = vpop.f32.mrf.mxu0
      %v775 = vadd.f32 0.0, %v774
      %776 = vdwg.mxu0
      %v777 = vadd.f32 %v592, %v731
      %v778 = vadd.f32 %v606, %v745
      %v779 = vadd.f32 %v620, %v759
      %v780 = vadd.f32 %v634, %v773
      %v781 = vadd.f32 %v594, %v733
      %v782 = vadd.f32 %v608, %v747
      %v783 = vadd.f32 %v622, %v761
      %v784 = vadd.f32 %v636, %v775
      %v785 = vld [vmem:[%s1] sm:$0xff]
      %v786 = vld [vmem:[%s1 + $0x8] sm:$0xff]
      %788 = vset.pattern.permute.xlu0 0
      %789 = vperm.xlu0 %788, %v785
      %v790 = vpop.permute.xlu0 %789
      %793 = vset.pattern.permute.xlu0 0
      %794 = vperm.xlu0 %793, %v786
      %v795 = vpop.permute.xlu0 %794
      %v797 = vadd.f32 %v777, %v790
      %v798 = vadd.f32 %v778, %v790
      %v799 = vadd.f32 %v779, %v790
      %v800 = vadd.f32 %v780, %v790
      %v801 = vadd.f32 %v781, %v795
      %v802 = vadd.f32 %v782, %v795
      %v803 = vadd.f32 %v783, %v795
      %v804 = vadd.f32 %v784, %v795
      %v805 = vtanh.pop %v797
      %v806 = vtanh.pop %v798
      %v807 = vtanh.pop %v799
      %v808 = vtanh.pop %v800
      %v809 = vxor.u32 %v801, 2147483648
      %v810 = vxor.u32 %v802, 2147483648
      %v811 = vxor.u32 %v803, 2147483648
      %v812 = vxor.u32 %v804, 2147483648
      %v813 = vmul.f32 %v809, 1.442695
      %v814 = vpow.pop %v813
      %v815 = vmul.f32 %v810, 1.442695
      %v816 = vpow.pop %v815
      %v817 = vmul.f32 %v811, 1.442695
      %v818 = vpow.pop %v817
      %v819 = vmul.f32 %v812, 1.442695
      %v820 = vpow.pop %v819
      %v821 = vadd.f32 %v814, 1.0
      %v822 = vadd.f32 %v816, 1.0
      %v823 = vadd.f32 %v818, 1.0
      %v824 = vadd.f32 %v820, 1.0
      %v825 = vrcp.pop %v821
      %v826 = vmul.f32 %v821, %v825
      %v827 = vsub.f32 1.0, %v826
      %v828 = vmul.f32 %v825, %v827
      %v829 = vadd.f32 %v825, %v828
      %vm830 = vweird.f32 %v821
      %vm831 = vweird.f32 %v825
      %vm832 = vmor %vm830, %vm831
      %v833 = vsel %vm832, %v825, %v829
      %v834 = vand.u32 2147483647, %v821
      %vm835 = vcmp.eq.f32.partialorder %v834, 8.507059e+37
      %v836 = vand.u32 %v821, 2147483648
      %v837 = vor.u32 1.1754944e-38, %v836
      %v838 = vsel %vm835, %v837, %v833
      %v839 = vmul.f32 1.0, %v838
      %v840 = vrcp.pop %v822
      %v841 = vmul.f32 %v822, %v840
      %v842 = vsub.f32 1.0, %v841
      %v843 = vmul.f32 %v840, %v842
      %v844 = vadd.f32 %v840, %v843
      %vm845 = vweird.f32 %v822
      %vm846 = vweird.f32 %v840
      %vm847 = vmor %vm845, %vm846
      %v848 = vsel %vm847, %v840, %v844
      %v849 = vand.u32 2147483647, %v822
      %vm850 = vcmp.eq.f32.partialorder %v849, 8.507059e+37
      %v851 = vand.u32 %v822, 2147483648
      %v852 = vor.u32 1.1754944e-38, %v851
      %v853 = vsel %vm850, %v852, %v848
      %v854 = vmul.f32 1.0, %v853
      %v855 = vrcp.pop %v823
      %v856 = vmul.f32 %v823, %v855
      %v857 = vsub.f32 1.0, %v856
      %v858 = vmul.f32 %v855, %v857
      %v859 = vadd.f32 %v855, %v858
      %vm860 = vweird.f32 %v823
      %vm861 = vweird.f32 %v855
      %vm862 = vmor %vm860, %vm861
      %v863 = vsel %vm862, %v855, %v859
      %v864 = vand.u32 2147483647, %v823
      %vm865 = vcmp.eq.f32.partialorder %v864, 8.507059e+37
      %v866 = vand.u32 %v823, 2147483648
      %v867 = vor.u32 1.1754944e-38, %v866
      %v868 = vsel %vm865, %v867, %v863
      %v869 = vmul.f32 1.0, %v868
      %v870 = vrcp.pop %v824
      %v871 = vmul.f32 %v824, %v870
      %v872 = vsub.f32 1.0, %v871
      %v873 = vmul.f32 %v870, %v872
      %v874 = vadd.f32 %v870, %v873
      %vm875 = vweird.f32 %v824
      %vm876 = vweird.f32 %v870
      %vm877 = vmor %vm875, %vm876
      %v878 = vsel %vm877, %v870, %v874
      %v879 = vand.u32 2147483647, %v824
      %vm880 = vcmp.eq.f32.partialorder %v879, 8.507059e+37
      %v881 = vand.u32 %v824, 2147483648
      %v882 = vor.u32 1.1754944e-38, %v881
      %v883 = vsel %vm880, %v882, %v878
      %v884 = vmul.f32 1.0, %v883
      %v885 = vld [vmem:[#allocation2] sm:$0xff]
      %v886 = vld [vmem:[#allocation2 + $0x8] sm:$0xff]
      %v887 = vld [vmem:[#allocation2 + $0x10] sm:$0xff]
      %v888 = vld [vmem:[#allocation2 + $0x18] sm:$0xff]
      %v889 = vmul.f32 %v839, %v885
      %v890 = vmul.f32 %v854, %v886
      %v891 = vmul.f32 %v869, %v887
      %v892 = vmul.f32 %v884, %v888
      %v893 = vsub.f32 1.0, %v839
      %v894 = vsub.f32 1.0, %v854
      %v895 = vsub.f32 1.0, %v869
      %v896 = vsub.f32 1.0, %v884
      %v897 = vmul.f32 %v893, %v805
      %v898 = vmul.f32 %v894, %v806
      %v899 = vmul.f32 %v895, %v807
      %v900 = vmul.f32 %v896, %v808
      %v901 = vadd.f32 %v889, %v897
      %v902 = vadd.f32 %v890, %v898
      %v903 = vadd.f32 %v891, %v899
      %v904 = vadd.f32 %v892, %v900
      %905 = vst [vmem:[#allocation2] sm:$0xff] %v901
      %906 = vst [vmem:[#allocation2 + $0x8] sm:$0xff] %v902
      %907 = vst [vmem:[#allocation2 + $0x10] sm:$0xff] %v903
      %908 = vst [vmem:[#allocation2 + $0x18] sm:$0xff] %v904
      %909 = vst [vmem:[%s348] sm:$0xff] %v901
      %910 = vst [vmem:[%s348 + $0x8] sm:$0xff] %v902
      %911 = vst [vmem:[%s348 + $0x10] sm:$0xff] %v903
      %912 = vst [vmem:[%s348 + $0x18] sm:$0xff] %v904
      %s913 = smul.u32 4, %s20
      %p914 = scmp.lt.s32.totalorder %s21, 7
      %s915 = scalar_select %p914, %s21, 7
      %p916 = scmp.lt.s32.totalorder %s913, 3
      %s917 = scalar_select %p916, %s913, 3
      %s918 = smul.addr %s915, 4
      %s919 = sadd.s32 %s917, %s918
      %s920 = smul.addr %s919, 8
      %s921 = scalar_lea.vmem %s5, %s920
      // Predicated region
      $region45: #{qrnn_conv3d_layer.1} parent=39 // pred_check
        %p922 = pneg %p178
      $region46: #{qrnn_conv3d_layer.1} parent=39 // pred_check_branch
        %924 = sbr.rel (%p922) target = $region48
      $region47: #{qrnn_conv3d_layer.1} parent=39 // pred_region
        %s925 = smul.u32 4, %s20
      $region48: #{qrnn_conv3d_layer.1} parent=39 // pred_fallthru
        _
    $region40: #{qrnn_conv3d_layer.1} parent=5 // pred_fallthru
      _
    %p926 = scmp.le.s32.totalorder 2, %s11
    // Predicated region
    $region49: #{qrnn_conv3d_layer.1} parent=5 // pred_check
      %p927 = pneg %p926
    $region50: #{qrnn_conv3d_layer.1} parent=5 // pred_check_branch
      %929 = sbr.rel (%p927) target = $region52
    $region51: #{qrnn_conv3d_layer.1} parent=5 // pred_region
      %s930 = ssub.s32 %s11, 2
      // Predicated region
      $region53: #{qrnn_conv3d_layer.1} parent=51 // pred_check
        %p931 = pneg %p184
      $region54: #{qrnn_conv3d_layer.1} parent=51 // pred_check_branch
        %933 = sbr.rel (%p931) target = $region56
      $region55: #{qrnn_conv3d_layer.1} parent=51 // pred_region
        %s934 = smul.u32 4, %s22
        %p935 = scmp.lt.s32.totalorder %s23, 7
        %s936 = scalar_select %p935, %s23, 7
        %p937 = scmp.lt.s32.totalorder %s934, 3
        %s938 = scalar_select %p937, %s934, 3
        %s939 = smul.addr %s936, 4
        %s940 = sadd.s32 %s938, %s939
        %s941 = smul.addr %s940, 8
        %s942 = scalar_lea.vmem %s5, %s941
      $region56: #{qrnn_conv3d_layer.1} parent=51 // pred_fallthru
        _
    $region52: #{qrnn_conv3d_layer.1} parent=5 // pred_fallthru
      _
  $region6: #{qrnn_conv3d_layer.1} parent=0 // loop_footer
    %s15 = sadd.s32 1, %s11
  $region7: #{qrnn_conv3d_layer.1} parent=0 // loop_footer_branch
    %10 = sbr.rel target = $region3
  $region8: #{qrnn_conv3d_layer.1} parent=0 // loop_exit
    _

</llo_original>
